<compile_context>
chip_gen: v7x
topology: tpu7x:2x2x1
jax: 0.10.0
libtpu: 0.0.40
codegen_flags: <defaults>
</compile_context>

<pallas_src>
import jax
import jax.numpy as jnp
from jax.experimental import pallas as pl
from jax.experimental.pallas import tpu as pltpu


_NEG_BIG = -1.0e30  # bias for padded vocab columns: exp() == 0, never equals a label


def _nll_kernel(x_ref, w_ref, b_ref, seq_ref, ce_ref, acc_ref, m_ref, l_ref, c_ref):
    vi = pl.program_id(1)
    ki = pl.program_id(2)
    nv = pl.num_programs(1)
    nk = pl.num_programs(2)

    # ---- init running-softmax state at the first vocab/K tile of a token tile ----
    @pl.when(jnp.logical_and(vi == 0, ki == 0))
    def _():
        m_ref[...] = jnp.full_like(m_ref, -jnp.inf)   # running max
        l_ref[...] = jnp.zeros_like(l_ref)            # running sum(exp)
        c_ref[...] = jnp.zeros_like(c_ref)            # correct-class logit

    # ---- init logits accumulator at the first K tile of each (m, v) tile ----
    @pl.when(ki == 0)
    def _():
        acc_ref[...] = jnp.zeros_like(acc_ref)

    # ---- MXU: bf16 operands, f32 accumulation ----
    acc_ref[...] += jnp.dot(x_ref[...], w_ref[...],
                            preferred_element_type=jnp.float32)

    is_last_k = ki == nk - 1

    # ---- online-softmax update once the (tm, tn) logits tile is complete ----
    @pl.when(is_last_k)
    def _():
        tn = acc_ref.shape[1]
        logits = acc_ref[...] + b_ref[...]                      # (tm, tn) f32
        labels = seq_ref[...]                                   # (tm, 1)  i32

        # label gather via masked select (no materialized f32 one-hot)
        col = jax.lax.broadcasted_iota(jnp.int32, logits.shape, 1) + vi * tn
        hit = col == labels
        c_ref[...] += jnp.sum(jnp.where(hit, logits, 0.0), axis=-1, keepdims=True)

        m_old = m_ref[...]
        m_new = jnp.maximum(m_old, jnp.max(logits, axis=-1, keepdims=True))
        l_ref[...] = l_ref[...] * jnp.exp(m_old - m_new) + jnp.sum(
            jnp.exp(logits - m_new), axis=-1, keepdims=True)
        m_ref[...] = m_new

    # ---- finalize: ce = logsumexp - correct = m + log(l) - c ----
    @pl.when(jnp.logical_and(is_last_k, vi == nv - 1))
    def _():
        ce_ref[...] = m_ref[...] + jnp.log(l_ref[...]) - c_ref[...]


def _round_up(x, m):
    return ((x + m - 1) // m) * m


def nll_criterion_forward(x_start, seqs, w, b, *, tm=256, tn=1024, tk=512,
                          param_dtype=jnp.bfloat16):
    """Returns {'nll_loss': loss} with loss shape [B].

    x_start: [B, T, H] activations fed to the LM head (weight [H, V], bias [V]);
    seqs:    [B, T] int token ids, required to be in [0, V) (as in torch CE).
    """
    B, T, H = x_start.shape
    V = w.shape[1]
    M = B * T

    # --- tile sizes, clamped to the padded problem ---
    tm = min(tm, _round_up(M, 16))
    M_pad = _round_up(M, tm)

    tn = _round_up(min(tn, _round_up(V, 128)), 128)
    V_pad = _round_up(V, tn)

    if H <= tk:
        tk = H
        H_pad = H
    else:
        tk = _round_up(tk, 128)
        H_pad = _round_up(H, tk)

    # --- 2-D, padded operands (padding contributes nothing to real tokens) ---
    x2 = jnp.pad(x_start.reshape(M, H), ((0, M_pad - M), (0, H_pad - H)))
    x2 = x2.astype(param_dtype)                                  # bf16 MXU operand
    w_p = jnp.pad(w, ((0, H_pad - H), (0, V_pad - V))).astype(param_dtype)
    b_p = jnp.pad(b.astype(jnp.float32), ((0, V_pad - V),),
                  constant_values=_NEG_BIG).reshape(1, V_pad)    # f32 bias
    labels = jnp.pad(seqs.reshape(M, 1).astype(jnp.int32), ((0, M_pad - M), (0, 0)))

    grid = (M_pad // tm, V_pad // tn, H_pad // tk)

    ce = pl.pallas_call(
        _nll_kernel,
        out_shape=jax.ShapeDtypeStruct((M_pad, 1), jnp.float32),
        grid_spec=pltpu.PrefetchScalarGridSpec(
            num_scalar_prefetch=0,
            grid=grid,
            in_specs=[
                pl.BlockSpec((tm, tk), lambda mi, vi, ki: (mi, ki)),   # x
                pl.BlockSpec((tk, tn), lambda mi, vi, ki: (ki, vi)),   # W
                pl.BlockSpec((1, tn), lambda mi, vi, ki: (0, vi)),     # bias
                pl.BlockSpec((tm, 1), lambda mi, vi, ki: (mi, 0)),     # labels
            ],
            out_specs=pl.BlockSpec((tm, 1), lambda mi, vi, ki: (mi, 0)),
            scratch_shapes=[
                pltpu.VMEM((tm, tn), jnp.float32),   # logits tile accumulator
                pltpu.VMEM((tm, 1), jnp.float32),    # running max  m
                pltpu.VMEM((tm, 1), jnp.float32),    # running sum  l
                pltpu.VMEM((tm, 1), jnp.float32),    # correct-class logit c
            ],
        ),
        compiler_params=pltpu.CompilerParams(
            dimension_semantics=("parallel", "arbitrary", "arbitrary"),
            vmem_limit_bytes=64 * 1024 * 1024,
        ),
    )(x2, w_p, b_p, labels)

    ce = ce[:M, 0].reshape(B, T)
    # TODO(synk): the original NllCriterion.forward applies no padding mask /
    # ignore_index, so the plain mean over T matches the PyTorch semantics.
    return {"nll_loss": jnp.mean(ce, axis=-1)}


def _reference(x_start, seqs, w, b, param_dtype=jnp.bfloat16):
    # Same bf16-quantized operands as the kernel; all softmax math in f32.
    xf = x_start.astype(param_dtype).astype(jnp.float32)
    wf = w.astype(param_dtype).astype(jnp.float32)
    logits = jnp.einsum("bth,hv->btv", xf, wf,
                        preferred_element_type=jnp.float32) + b
    logp = jax.nn.log_softmax(logits, axis=-1)
    ce = -jnp.take_along_axis(logp, seqs[..., None], axis=-1)[..., 0]
    return ce.mean(-1)


if __name__ == "__main__":
    B, T, H, V = 2, 8, 32, 128   # batch, seq, hidden, vocab (small smoke-test shapes)

    key = jax.random.PRNGKey(0)
    kx, kw, kb, ks = jax.random.split(key, 4)

    x_start = jax.random.normal(kx, (B, T, H), dtype=jnp.float32)
    seqs = jax.random.randint(ks, (B, T), 0, V, dtype=jnp.int32)

    # Deterministic synthetic LM-head params (model.compute_logits ~= Linear(H, V)).
    w = jax.random.normal(kw, (H, V), dtype=jnp.float32) * (1.0 / jnp.sqrt(H))
    b = jax.random.normal(kb, (V,), dtype=jnp.float32) * 0.01

    out = nll_criterion_forward(x_start, seqs, w, b)
    loss = jax.block_until_ready(out["nll_loss"])

    ref = _reference(x_start, seqs, w, b)
    assert loss.shape == (B,)
    assert jnp.allclose(loss, ref, atol=1e-4, rtol=1e-4), (loss, ref)

    print("KERNEL_OK")
</pallas_src>

<mosaic_0001>
module attributes {stable_mosaic.version = 11 : i64} {
  func.func @_nll_kernel(%arg0: i32, %arg1: i32, %arg2: i32, %arg3: memref<16x32xbf16, #tpu.memory_space<vmem>>, %arg4: memref<32x128xbf16, #tpu.memory_space<vmem>>, %arg5: memref<1x128xf32, #tpu.memory_space<vmem>>, %arg6: memref<16x1xi32, #tpu.memory_space<vmem>>, %arg7: memref<16x1xf32, #tpu.memory_space<vmem>>, %arg8: memref<16x128xf32, #tpu.memory_space<vmem>>, %arg9: memref<16x1xf32, #tpu.memory_space<vmem>>, %arg10: memref<16x1xf32, #tpu.memory_space<vmem>>, %arg11: memref<16x1xf32, #tpu.memory_space<vmem>>) attributes {dimension_semantics = [#tpu.dimension_semantics<parallel>, #tpu.dimension_semantics<arbitrary>, #tpu.dimension_semantics<arbitrary>], iteration_bounds = array<i64: 1, 1, 1>, scalar_prefetch = 0 : i64, scratch_operands = 4 : i64, tpu.core_type = #tpu.core_type<tc>, window_params = [{transform_indices = @transform_0, window_bounds = array<i64: 16, 32>}, {transform_indices = @transform_1, window_bounds = array<i64: 32, 128>}, {transform_indices = @transform_2, window_bounds = array<i64: 1, 128>}, {transform_indices = @transform_3, window_bounds = array<i64: 16, 1>}, {transform_indices = @transform_4, window_bounds = array<i64: 16, 1>}]} {
    %c0_i32 = arith.constant 0 : i32
    %0 = arith.cmpi eq, %arg1, %c0_i32 : i32
    %c0_i32_0 = arith.constant 0 : i32
    %1 = arith.cmpi eq, %arg2, %c0_i32_0 : i32
    %2 = arith.andi %0, %1 : i1
    %3 = arith.extui %2 : i1 to i32
    %c0_i32_1 = arith.constant 0 : i32
    %4 = arith.cmpi ne, %3, %c0_i32_1 : i32
    scf.if %4 {
      %cst_15 = arith.constant 0xFF800000 : f32
      %21 = vector.broadcast %cst_15 : f32 to vector<16x1xf32>
      %c0_16 = arith.constant 0 : index
      %c0_17 = arith.constant 0 : index
      %22 = vector.load %arg9[%c0_16, %c0_17] : memref<16x1xf32, #tpu.memory_space<vmem>>, vector<16x1xf32>
      tpu.vector_store %arg9[%c0_16, %c0_17], %21 {strides = array<i32>} : memref<16x1xf32, #tpu.memory_space<vmem>>, vector<16x1xf32>,
      %cst_18 = arith.constant 0.000000e+00 : f32
      %23 = vector.broadcast %cst_18 : f32 to vector<16x1xf32>
      %c0_19 = arith.constant 0 : index
      %c0_20 = arith.constant 0 : index
      %24 = vector.load %arg10[%c0_19, %c0_20] : memref<16x1xf32, #tpu.memory_space<vmem>>, vector<16x1xf32>
      tpu.vector_store %arg10[%c0_19, %c0_20], %23 {strides = array<i32>} : memref<16x1xf32, #tpu.memory_space<vmem>>, vector<16x1xf32>,
      %cst_21 = arith.constant 0.000000e+00 : f32
      %25 = vector.broadcast %cst_21 : f32 to vector<16x1xf32>
      %c0_22 = arith.constant 0 : index
      %c0_23 = arith.constant 0 : index
      %26 = vector.load %arg11[%c0_22, %c0_23] : memref<16x1xf32, #tpu.memory_space<vmem>>, vector<16x1xf32>
      tpu.vector_store %arg11[%c0_22, %c0_23], %25 {strides = array<i32>} : memref<16x1xf32, #tpu.memory_space<vmem>>, vector<16x1xf32>,
    } else {
    }
    %c0_i32_2 = arith.constant 0 : i32
    %5 = arith.cmpi eq, %arg2, %c0_i32_2 : i32
    %6 = arith.extui %5 : i1 to i32
    %c0_i32_3 = arith.constant 0 : i32
    %7 = arith.cmpi ne, %6, %c0_i32_3 : i32
    scf.if %7 {
      %cst_15 = arith.constant 0.000000e+00 : f32
      %21 = vector.broadcast %cst_15 : f32 to vector<16x128xf32>
      %c0_16 = arith.constant 0 : index
      %c0_17 = arith.constant 0 : index
      %22 = vector.load %arg8[%c0_16, %c0_17] : memref<16x128xf32, #tpu.memory_space<vmem>>, vector<16x128xf32>
      tpu.vector_store %arg8[%c0_16, %c0_17], %21 {strides = array<i32>} : memref<16x128xf32, #tpu.memory_space<vmem>>, vector<16x128xf32>,
    } else {
    }
    %c0 = arith.constant 0 : index
    %c0_4 = arith.constant 0 : index
    %8 = vector.load %arg8[%c0, %c0_4] : memref<16x128xf32, #tpu.memory_space<vmem>>, vector<16x128xf32>
    %c0_5 = arith.constant 0 : index
    %c0_6 = arith.constant 0 : index
    %9 = vector.load %arg3[%c0_5, %c0_6] : memref<16x32xbf16, #tpu.memory_space<vmem>>, vector<16x32xbf16>
    %c0_7 = arith.constant 0 : index
    %c0_8 = arith.constant 0 : index
    %10 = vector.load %arg4[%c0_7, %c0_8] : memref<32x128xbf16, #tpu.memory_space<vmem>>, vector<32x128xbf16>
    %cst = arith.constant dense<0.000000e+00> : vector<16x128xf32>
    %11 = tpu.matmul %9, %10, %cst {dimension_numbers = #tpu.dot_dimension_numbers<[1], [0], [0], [1], [0, 0, 1, 1], [], []>} : vector<16x32xbf16>, vector<32x128xbf16>, vector<16x128xf32> -> vector<16x128xf32>
    %12 = arith.addf %8, %11 : vector<16x128xf32>
    %c0_9 = arith.constant 0 : index
    %c0_10 = arith.constant 0 : index
    %13 = vector.load %arg8[%c0_9, %c0_10] : memref<16x128xf32, #tpu.memory_space<vmem>>, vector<16x128xf32>
    tpu.vector_store %arg8[%c0_9, %c0_10], %12 {strides = array<i32>} : memref<16x128xf32, #tpu.memory_space<vmem>>, vector<16x128xf32>,
    %c0_i32_11 = arith.constant 0 : i32
    %14 = arith.cmpi eq, %arg2, %c0_i32_11 : i32
    %15 = arith.extui %14 : i1 to i32
    %c0_i32_12 = arith.constant 0 : i32
    %16 = arith.cmpi ne, %15, %c0_i32_12 : i32
    scf.if %16 {
      %c0_15 = arith.constant 0 : index
      %c0_16 = arith.constant 0 : index
      %21 = vector.load %arg8[%c0_15, %c0_16] : memref<16x128xf32, #tpu.memory_space<vmem>>, vector<16x128xf32>
      %c0_17 = arith.constant 0 : index
      %c0_18 = arith.constant 0 : index
      %22 = vector.load %arg5[%c0_17, %c0_18] : memref<1x128xf32, #tpu.memory_space<vmem>>, vector<1x128xf32>
      %23 = vector.broadcast %22 : vector<1x128xf32> to vector<16x128xf32>
      %24 = arith.addf %21, %23 : vector<16x128xf32>
      %c0_19 = arith.constant 0 : index
      %c0_20 = arith.constant 0 : index
      %25 = vector.load %arg6[%c0_19, %c0_20] : memref<16x1xi32, #tpu.memory_space<vmem>>, vector<16x1xi32>
      %26 = tpu.iota {dimensions = array<i32: 1>} : vector<16x128xi32>
      %c128_i32 = arith.constant 128 : i32
      %27 = arith.muli %arg1, %c128_i32 : i32
      %28 = vector.broadcast %27 : i32 to vector<16x128xi32>
      %29 = arith.addi %26, %28 : vector<16x128xi32>
      %30 = vector.broadcast %25 : vector<16x1xi32> to vector<16x128xi32>
      %31 = arith.cmpi eq, %29, %30 : vector<16x128xi32>
      %c0_21 = arith.constant 0 : index
      %c0_22 = arith.constant 0 : index
      %32 = vector.load %arg11[%c0_21, %c0_22] : memref<16x1xf32, #tpu.memory_space<vmem>>, vector<16x1xf32>
      %cst_23 = arith.constant 0.000000e+00 : f32
      %33 = vector.broadcast %cst_23 : f32 to vector<16x128xf32>
      %34 = arith.select %31, %24, %33 : vector<16x128xi1>, vector<16x128xf32>
      %cst_24 = arith.constant dense<0.000000e+00> : vector<16xf32>
      %35 = vector.multi_reduction <add>, %34, %cst_24 [1] : vector<16x128xf32> to vector<16xf32>
      %36 = vector.shape_cast %35 : vector<16xf32> to vector<16x1xf32>
      %37 = arith.addf %32, %36 : vector<16x1xf32>
      %c0_25 = arith.constant 0 : index
      %c0_26 = arith.constant 0 : index
      %38 = vector.load %arg11[%c0_25, %c0_26] : memref<16x1xf32, #tpu.memory_space<vmem>>, vector<16x1xf32>
      tpu.vector_store %arg11[%c0_25, %c0_26], %37 {strides = array<i32>} : memref<16x1xf32, #tpu.memory_space<vmem>>, vector<16x1xf32>,
      %c0_27 = arith.constant 0 : index
      %c0_28 = arith.constant 0 : index
      %39 = vector.load %arg9[%c0_27, %c0_28] : memref<16x1xf32, #tpu.memory_space<vmem>>, vector<16x1xf32>
      %cst_29 = arith.constant dense<0xFF800000> : vector<16xf32>
      %40 = vector.multi_reduction <maximumf>, %24, %cst_29 [1] : vector<16x128xf32> to vector<16xf32>
      %41 = vector.shape_cast %40 : vector<16xf32> to vector<16x1xf32>
      %42 = arith.maximumf %39, %41 : vector<16x1xf32>
      %c0_30 = arith.constant 0 : index
      %c0_31 = arith.constant 0 : index
      %43 = vector.load %arg10[%c0_30, %c0_31] : memref<16x1xf32, #tpu.memory_space<vmem>>, vector<16x1xf32>
      %44 = arith.subf %39, %42 : vector<16x1xf32>
      %45 = math.exp %44 : vector<16x1xf32>
      %46 = arith.mulf %43, %45 : vector<16x1xf32>
      %47 = vector.broadcast %42 : vector<16x1xf32> to vector<16x128xf32>
      %48 = arith.subf %24, %47 : vector<16x128xf32>
      %49 = math.exp %48 : vector<16x128xf32>
      %cst_32 = arith.constant dense<0.000000e+00> : vector<16xf32>
      %50 = vector.multi_reduction <add>, %49, %cst_32 [1] : vector<16x128xf32> to vector<16xf32>
      %51 = vector.shape_cast %50 : vector<16xf32> to vector<16x1xf32>
      %52 = arith.addf %46, %51 : vector<16x1xf32>
      %c0_33 = arith.constant 0 : index
      %c0_34 = arith.constant 0 : index
      %53 = vector.load %arg10[%c0_33, %c0_34] : memref<16x1xf32, #tpu.memory_space<vmem>>, vector<16x1xf32>
      tpu.vector_store %arg10[%c0_33, %c0_34], %52 {strides = array<i32>} : memref<16x1xf32, #tpu.memory_space<vmem>>, vector<16x1xf32>,
      %c0_35 = arith.constant 0 : index
      %c0_36 = arith.constant 0 : index
      %54 = vector.load %arg9[%c0_35, %c0_36] : memref<16x1xf32, #tpu.memory_space<vmem>>, vector<16x1xf32>
      tpu.vector_store %arg9[%c0_35, %c0_36], %42 {strides = array<i32>} : memref<16x1xf32, #tpu.memory_space<vmem>>, vector<16x1xf32>,
    } else {
    }
    %c0_i32_13 = arith.constant 0 : i32
    %17 = arith.cmpi eq, %arg1, %c0_i32_13 : i32
    %18 = arith.andi %14, %17 : i1
    %19 = arith.extui %18 : i1 to i32
    %c0_i32_14 = arith.constant 0 : i32
    %20 = arith.cmpi ne, %19, %c0_i32_14 : i32
    scf.if %20 {
      %c0_15 = arith.constant 0 : index
      %c0_16 = arith.constant 0 : index
      %21 = vector.load %arg9[%c0_15, %c0_16] : memref<16x1xf32, #tpu.memory_space<vmem>>, vector<16x1xf32>
      %c0_17 = arith.constant 0 : index
      %c0_18 = arith.constant 0 : index
      %22 = vector.load %arg10[%c0_17, %c0_18] : memref<16x1xf32, #tpu.memory_space<vmem>>, vector<16x1xf32>
      %23 = math.log %22 : vector<16x1xf32>
      %24 = arith.addf %21, %23 : vector<16x1xf32>
      %c0_19 = arith.constant 0 : index
      %c0_20 = arith.constant 0 : index
      %25 = vector.load %arg11[%c0_19, %c0_20] : memref<16x1xf32, #tpu.memory_space<vmem>>, vector<16x1xf32>
      %26 = arith.subf %24, %25 : vector<16x1xf32>
      %c0_21 = arith.constant 0 : index
      %c0_22 = arith.constant 0 : index
      %27 = vector.load %arg7[%c0_21, %c0_22] : memref<16x1xf32, #tpu.memory_space<vmem>>, vector<16x1xf32>
      tpu.vector_store %arg7[%c0_21, %c0_22], %26 {strides = array<i32>} : memref<16x1xf32, #tpu.memory_space<vmem>>, vector<16x1xf32>,
    } else {
    }
    return
  }
  func.func @transform_0(%arg0: i32, %arg1: i32, %arg2: i32) -> (i32, i32) {
    %c0_i32 = arith.constant 0 : i32
    return %arg0, %arg2 : i32, i32
  }
  func.func @transform_1(%arg0: i32, %arg1: i32, %arg2: i32) -> (i32, i32) {
    %c0_i32 = arith.constant 0 : i32
    return %arg2, %arg1 : i32, i32
  }
  func.func @transform_2(%arg0: i32, %arg1: i32, %arg2: i32) -> (i32, i32) {
    %c0_i32 = arith.constant 0 : i32
    %c0_i32_0 = arith.constant 0 : i32
    return %c0_i32, %arg1 : i32, i32
  }
  func.func @transform_3(%arg0: i32, %arg1: i32, %arg2: i32) -> (i32, i32) {
    %c0_i32 = arith.constant 0 : i32
    %c0_i32_0 = arith.constant 0 : i32
    return %arg0, %c0_i32 : i32, i32
  }
  func.func @transform_4(%arg0: i32, %arg1: i32, %arg2: i32) -> (i32, i32) {
    %c0_i32 = arith.constant 0 : i32
    %c0_i32_0 = arith.constant 0 : i32
    return %arg0, %c0_i32 : i32, i32
  }
}

</mosaic_0001>

<llo_original>
// kernel: tpu_custom_call.1
$region0: #{tpu_custom_call.1}
  #allocation0 [shape = 'u32[]', space=smem, size = 0x4, offset = 0x4, fixed_abs, tag = 'smem constant byte address 0x4 - core index']
  #allocation1 [shape = 'u32[144,128]{1,0:T(1,128)}', space=vmem, size = 0x12000, scoped, tag = 'internal scratch']
  #allocation2 [shape = 'f32[16,128]{1,0:T(8,128)}', space=vmem, size = 0x2000, scoped, tag = 'scratch operand']
  #allocation3 [shape = 'f32[16,1]{1,0:T(8,128)}', space=vmem, size = 0x2000, scoped, tag = 'scratch operand']
  #allocation4 [shape = 'f32[16,1]{1,0:T(8,128)}', space=vmem, size = 0x2000, scoped, tag = 'scratch operand']
  #allocation5 [shape = 'f32[16,1]{1,0:T(8,128)}', space=vmem, size = 0x2000, scoped, tag = 'scratch operand']
  %s0 = inlined_call_operand.hbm [shape: bf16[16,32], index: 0, kind: input, shape index: {}]
  %s1 = inlined_call_operand.hbm [shape: bf16[32,128], index: 1, kind: input, shape index: {}]
  %s2 = inlined_call_operand.hbm [shape: f32[1,128], index: 2, kind: input, shape index: {}]
  %s3 = inlined_call_operand.hbm [shape: s32[16,1], index: 3, kind: input, shape index: {}]
  %s4 = inlined_call_operand.hbm [shape: f32[16,1], index: 4, kind: output, shape index: {}]
  %s5 = sld [smem:[#allocation0]]
  $region58: #{tpu_custom_call.1} parent=0
    _
  %s7 = ssub.s32 1, %s5
  %s8 = scalar_select 0, %s7, %s5
  $region1: #{tpu_custom_call.1} parent=0
    #allocation6 [shape = 'u8[4096]{0}', space=vmem, size = 0x1000, scoped, tag = 'input window, operand 0, single buffered']
    #allocation7 [shape = 's32[1]{0}', space=sflag, size = 0x4, scoped, tag = 'scoped memory for tpu_custom_call.1']
    #allocation8 [shape = 's32[1]{0}', space=sflag, size = 0x4, scoped, tag = 'scoped memory for tpu_custom_call.1']
    #allocation9 [shape = 'u8[8192]{0}', space=vmem, size = 0x2000, scoped, tag = 'input window, operand 1, single buffered']
    #allocation10 [shape = 's32[1]{0}', space=sflag, size = 0x4, scoped, tag = 'scoped memory for tpu_custom_call.1']
    #allocation11 [shape = 'u8[512]{0}', space=vmem, size = 0x400, scoped, tag = 'input window, operand 2, single buffered']
    #allocation12 [shape = 'u8[8192]{0}', space=vmem, size = 0x2000, scoped, tag = 'input window, operand 3, single buffered']
    #allocation13 [shape = 's32[1]{0}', space=sflag, size = 0x4, scoped, tag = 'scoped memory for tpu_custom_call.1']
    #allocation14 [shape = 'u8[8192]{0}', space=vmem, size = 0x2000, scoped, tag = 'output window, operand 0, single buffered']
    %9 = vsyncpa [#allocation7], 0
    %10 = vsyncpa [#allocation10], 0
    %11 = vsyncpa [#allocation13], 0
    %12 = vsyncpa [#allocation8], 0
    // Predicated region
    $region2: #{tpu_custom_call.1} parent=1 // pred_check
      _
    $region3: #{tpu_custom_call.1} parent=1 // pred_check_branch
      %14 = sbr.rel (0) target = $region5
    $region4: #{tpu_custom_call.1} parent=1 // pred_region
      %s16 = ssub.s32 128, 128
      %17 = vsyncadd [#allocation7], %s16
      %s18 = sshll.u32 [#allocation6], 4
      %s19 = int_to_ptr.vmem [resolvable:$true] %s18
      %24 = dma.hbm_to_vmem [thread:$0]  %s0, 128, %s19, [#allocation7], 64, 64, 4
    $region5: #{tpu_custom_call.1} parent=1 // pred_fallthru
      _
    // Predicated region
    $region6: #{tpu_custom_call.1} parent=1 // pred_check
      _
    $region7: #{tpu_custom_call.1} parent=1 // pred_check_branch
      %26 = sbr.rel (0) target = $region9
    $region8: #{tpu_custom_call.1} parent=1 // pred_region
      %s28 = ssub.s32 256, 256
      %29 = vsyncadd [#allocation10], %s28
      %s30 = sshll.u32 [#allocation9], 4
      %s31 = int_to_ptr.vmem [resolvable:$true] %s30
      %36 = dma.hbm_to_vmem [thread:$0]  %s1, 256, %s31, [#allocation10], 64, 64, 4
    $region9: #{tpu_custom_call.1} parent=1 // pred_fallthru
      _
    // Predicated region
    $region10: #{tpu_custom_call.1} parent=1 // pred_check
      _
    $region11: #{tpu_custom_call.1} parent=1 // pred_check_branch
      %38 = sbr.rel (0) target = $region13
    $region12: #{tpu_custom_call.1} parent=1 // pred_region
      %s40 = ssub.s32 16, 16
      %41 = vsyncadd [#allocation10], %s40
      %s43 = sshll.u32 [#allocation11], 4
      %s44 = int_to_ptr.vmem [resolvable:$true] %s43
      %46 = dma.hbm_to_vmem [thread:$0]  %s2, 16, %s44, [#allocation10]
    $region13: #{tpu_custom_call.1} parent=1 // pred_fallthru
      _
    // Predicated region
    $region14: #{tpu_custom_call.1} parent=1 // pred_check
      _
    $region15: #{tpu_custom_call.1} parent=1 // pred_check_branch
      %48 = sbr.rel (0) target = $region17
    $region16: #{tpu_custom_call.1} parent=1 // pred_region
      %s50 = ssub.s32 256, 256
      %51 = vsyncadd [#allocation13], %s50
      %s52 = sshll.u32 [#allocation12], 4
      %s53 = int_to_ptr.vmem [resolvable:$true] %s52
      %58 = dma.hbm_to_vmem [thread:$0]  %s3, 256, %s53, [#allocation13], 128, 128, 8
    $region17: #{tpu_custom_call.1} parent=1 // pred_fallthru
      _
    // Predicated region
    $region18: #{tpu_custom_call.1} parent=1 // pred_check
      _
    $region19: #{tpu_custom_call.1} parent=1 // pred_check_branch
      %60 = sbr.rel (0) target = $region21
    $region20: #{tpu_custom_call.1} parent=1 // pred_region
      %61 = dma.done [#allocation7], 128
    $region21: #{tpu_custom_call.1} parent=1 // pred_fallthru
      _
    // Predicated region
    $region22: #{tpu_custom_call.1} parent=1 // pred_check
      _
    $region23: #{tpu_custom_call.1} parent=1 // pred_check_branch
      %63 = sbr.rel (0) target = $region25
    $region24: #{tpu_custom_call.1} parent=1 // pred_region
      %64 = dma.done [#allocation10], 256
    $region25: #{tpu_custom_call.1} parent=1 // pred_fallthru
      _
    // Predicated region
    $region26: #{tpu_custom_call.1} parent=1 // pred_check
      _
    $region27: #{tpu_custom_call.1} parent=1 // pred_check_branch
      %66 = sbr.rel (0) target = $region29
    $region28: #{tpu_custom_call.1} parent=1 // pred_region
      %67 = dma.done [#allocation10], 16
    $region29: #{tpu_custom_call.1} parent=1 // pred_fallthru
      _
    // Predicated region
    $region30: #{tpu_custom_call.1} parent=1 // pred_check
      _
    $region31: #{tpu_custom_call.1} parent=1 // pred_check_branch
      %69 = sbr.rel (0) target = $region33
    $region32: #{tpu_custom_call.1} parent=1 // pred_region
      %70 = dma.done [#allocation13], 256
    $region33: #{tpu_custom_call.1} parent=1 // pred_fallthru
      _
    %p72 = scmp.eq.s32.totalorder 0, 0
    %p73 = scmp.eq.s32.totalorder 0, 0
    %p74 = pnand %p72, %p73
    %p75 = pneg %p74
    // Predicated region
    $region34: #{tpu_custom_call.1} parent=1 // pred_check
      _
    $region35: #{tpu_custom_call.1} parent=1 // pred_check_branch
      %77 = sbr.rel (%p74) target = $region37
    $region36: #{tpu_custom_call.1} parent=1 // pred_region
      %vm78 = vcmask 7168
      %79 = vst.msk [vmem:[#allocation3] sm:$0xff] %vm78, -inf
      %80 = vst.msk [vmem:[#allocation3 + $0x8] sm:$0xff] %vm78, -inf
      %81 = vst.msk [vmem:[#allocation4] sm:$0xff] %vm78, 0.0
      %82 = vst.msk [vmem:[#allocation4 + $0x8] sm:$0xff] %vm78, 0.0
      %83 = vst.msk [vmem:[#allocation5] sm:$0xff] %vm78, 0.0
      %84 = vst.msk [vmem:[#allocation5 + $0x8] sm:$0xff] %vm78, 0.0
    $region37: #{tpu_custom_call.1} parent=1 // pred_fallthru
      _
    // Predicated region
    $region38: #{tpu_custom_call.1} parent=1 // pred_check
      %p85 = pneg %p73
    $region39: #{tpu_custom_call.1} parent=1 // pred_check_branch
      %87 = sbr.rel (%p85) target = $region41
    $region40: #{tpu_custom_call.1} parent=1 // pred_region
      %88 = vst [vmem:[#allocation2] sm:$0xff] 0.0
      %89 = vst [vmem:[#allocation2 + $0x8] sm:$0xff] 0.0
    $region41: #{tpu_custom_call.1} parent=1 // pred_fallthru
      _
    %v90 = vld [vmem:[#allocation2] sm:$0xff]
    %v91 = vld [vmem:[#allocation2 + $0x8] sm:$0xff]
    %v92 = vld [vmem:[#allocation6] sm:$0xf]
    %v93 = vld [vmem:[#allocation6 + $0x4] sm:$0xf]
    %v94 = vld [vmem:[#allocation9] sm:$0xf]
    %v95 = vld [vmem:[#allocation9 + $0x4] sm:$0xf]
    %v96 = vld [vmem:[#allocation9 + $0x8] sm:$0xf]
    %v97 = vld [vmem:[#allocation9 + $0xc] sm:$0xf]
    %v100 = vunpack.c.l.b16 %v92
    %v101 = vunpack.c.l.b16 %v93
    %v102 = vpack.c.b16 %v101, %v100
    %v107 = vunpack.c.l.b16 %v94
    %v108 = vunpack.c.l.b16 %v95
    %v109 = vunpack.c.l.b16 %v96
    %v110 = vunpack.c.l.b16 %v97
    %v111 = vpack.c.b16 %v108, %v107
    %v112 = vpack.c.b16 %v110, %v109
    %vm115 = vcmask 261120
    %v117 = vsel %vm115, %v102, 0
    %119 = vmatprep.subr.bf16.mxu0 0
    %120 = vmatpush1.bf16.msra.mxu0 %v111
    %121 = vmatprep.subr.bf16.mxu0 0
    %122 = vmatpush1.bf16.msra.mxu0 %v112
    %123 = vmatprep.subr.bf16.mxu0 0
    %124 = vmatpush1.bf16.msra.mxu0 0
    %125 = vmatprep.subr.bf16.mxu0 0
    %126 = vmatpush1.bf16.msra.mxu0 0
    %127 = vmatprep.subr.bf16.mxu0 0
    %128 = vmatpush1.bf16.msra.mxu0 0
    %129 = vmatprep.subr.bf16.mxu0 0
    %130 = vmatpush1.bf16.msra.mxu0 0
    %131 = vmatprep.subr.bf16.mxu0 0
    %132 = vmatpush1.bf16.msra.mxu0 0
    %133 = vmatprep.subr.bf16.mxu0 0
    %134 = vmatpush1.bf16.msra.mxu0 0
    %135 = vmatprep.subr.bf16.mxu0 0
    %136 = vmatpush1.bf16.msra.mxu0 0
    %137 = vmatprep.subr.bf16.mxu0 0
    %138 = vmatpush1.bf16.msra.mxu0 0
    %139 = vmatprep.subr.bf16.mxu0 0
    %140 = vmatpush1.bf16.msra.mxu0 0
    %141 = vmatprep.subr.bf16.mxu0 0
    %142 = vmatpush1.bf16.msra.mxu0 0
    %143 = vmatprep.subr.bf16.mxu0 0
    %144 = vmatpush1.bf16.msra.mxu0 0
    %145 = vmatprep.subr.bf16.mxu0 0
    %146 = vmatpush1.bf16.msra.mxu0 0
    %147 = vmatprep.subr.bf16.mxu0 0
    %148 = vmatpush1.bf16.msra.mxu0 0
    %149 = vmatprep.subr.bf16.mxu0 0
    %150 = vmatpush1.bf16.msra.mxu0 0
    %151 = vmatprep.mubr.bf16.mxu0 0
    %152 = vmatmul.mubr.bf16.gmra.mrb[0].mxu0 %v117
    %v153 = vpop.f32.mrb[0].mxu0
    %v154 = vadd.f32 0.0, %v153
    %v155 = vpop.f32.mrb[0].mxu0
    %v156 = vpop.f32.mrb[0].mxu0
    %v157 = vadd.f32 0.0, %v156
    %v158 = vpop.f32.mrb[0].mxu0
    %159 = vdwg.mxu0
    %v160 = vadd.f32 %v90, %v154
    %v161 = vadd.f32 %v91, %v157
    %162 = vst [vmem:[#allocation2] sm:$0xff] %v160
    %163 = vst [vmem:[#allocation2 + $0x8] sm:$0xff] %v161
    // Predicated region
    $region42: #{tpu_custom_call.1} parent=1 // pred_check
      %p164 = pneg %p73
    $region43: #{tpu_custom_call.1} parent=1 // pred_check_branch
      %166 = sbr.rel (%p164) target = $region45
    $region44: #{tpu_custom_call.1} parent=1 // pred_region
      %v167 = vld [vmem:[#allocation2] sm:$0xff]
      %v168 = vld [vmem:[#allocation2 + $0x8] sm:$0xff]
      %v169 = vld [vmem:[#allocation11] sm:$0x1]
      %v171 = vlaneseq
      %v172 = vshrl.u32 %v171, 7
      %v173 = vsub.s32 0, %v172
      %v174 = vrot.slane %v169, %v173
      %v176 = vadd.f32 %v167, %v174
      %v177 = vadd.f32 %v168, %v174
      %v178 = vld [vmem:[#allocation12] sm:$0xff]
      %v179 = vld [vmem:[#allocation12 + $0x8] sm:$0xff]
      %v180 = vlaneseq
      %v181 = vand.u32 %v180, 127
      %s182 = smul.u32 0, 128
      %v183 = vstv %s182
      %v184 = vadd.s32 %v181, %v183
      %185 = vset.pattern.permute.xlu0 0
      %186 = vperm.xlu0 %185, %v178
      %v187 = vpop.permute.xlu0 %186
      %188 = vset.pattern.permute.xlu0 0
      %189 = vperm.xlu0 %188, %v179
      %v190 = vpop.permute.xlu0 %189
      %vm191 = vcmp.eq.s32.totalorder %v184, %v187
      %vm192 = vcmp.eq.s32.totalorder %v184, %v190
      %v193 = vld [vmem:[#allocation5] sm:$0xff]
      %v194 = vld [vmem:[#allocation5 + $0x8] sm:$0xff]
      %v195 = vsel %vm191, %v176, 0.0
      %v196 = vsel %vm192, %v177, 0.0
      %197 = vadd.xlane.f32.xlu0 %v195
      %v198 = vpop.xlane.xlu0 %197
      %199 = vadd.xlane.f32.xlu0 %v196
      %v200 = vpop.xlane.xlu0 %199
      %v201 = vadd.f32 %v193, %v198
      %v202 = vadd.f32 %v194, %v200
      %vm203 = vcmask 7168
      %204 = vst.msk [vmem:[#allocation5] sm:$0xff] %vm203, %v201
      %205 = vst.msk [vmem:[#allocation5 + $0x8] sm:$0xff] %vm203, %v202
      %v206 = vld [vmem:[#allocation3] sm:$0xff]
      %v207 = vld [vmem:[#allocation3 + $0x8] sm:$0xff]
      %208 = vmax.xlane.f32.xlu0 %v176
      %v209 = vpop.xlane.xlu0 %208
      %210 = vmax.xlane.f32.xlu0 %v177
      %v211 = vpop.xlane.xlu0 %210
      %v212 = vmax.f32 %v206, %v209
      %v213 = vmax.f32 %v207, %v211
      %v214 = vld [vmem:[#allocation4] sm:$0xff]
      %v215 = vld [vmem:[#allocation4 + $0x8] sm:$0xff]
      %v216 = vsub.f32 %v206, %v212
      %v217 = vsub.f32 %v207, %v213
      %v218 = vmul.f32 %v216, 1.442695
      %v219 = vpow.pop %v218
      %v220 = vmul.f32 %v217, 1.442695
      %v221 = vpow.pop %v220
      %v222 = vmul.f32 %v214, %v219
      %v223 = vmul.f32 %v215, %v221
      %225 = vset.pattern.permute.xlu0 0
      %226 = vperm.xlu0 %225, %v212
      %v227 = vpop.permute.xlu0 %226
      %230 = vset.pattern.permute.xlu0 0
      %231 = vperm.xlu0 %230, %v213
      %v232 = vpop.permute.xlu0 %231
      %v234 = vsub.f32 %v176, %v227
      %v235 = vsub.f32 %v177, %v232
      %v236 = vmul.f32 %v234, 1.442695
      %v237 = vpow.pop %v236
      %v238 = vmul.f32 %v235, 1.442695
      %v239 = vpow.pop %v238
      %240 = vadd.xlane.f32.xlu0 %v237
      %v241 = vpop.xlane.xlu0 %240
      %242 = vadd.xlane.f32.xlu0 %v239
      %v243 = vpop.xlane.xlu0 %242
      %v244 = vadd.f32 %v222, %v241
      %v245 = vadd.f32 %v223, %v243
      %246 = vst.msk [vmem:[#allocation4] sm:$0xff] %vm203, %v244
      %247 = vst.msk [vmem:[#allocation4 + $0x8] sm:$0xff] %vm203, %v245
      %248 = vst.msk [vmem:[#allocation3] sm:$0xff] %vm203, %v212
      %249 = vst.msk [vmem:[#allocation3 + $0x8] sm:$0xff] %vm203, %v213
    $region45: #{tpu_custom_call.1} parent=1 // pred_fallthru
      _
    // Predicated region
    $region46: #{tpu_custom_call.1} parent=1 // pred_check
      _
    $region47: #{tpu_custom_call.1} parent=1 // pred_check_branch
      %251 = sbr.rel (%p74) target = $region49
    $region48: #{tpu_custom_call.1} parent=1 // pred_region
      %v252 = vld [vmem:[#allocation3] sm:$0xff]
      %v253 = vld [vmem:[#allocation3 + $0x8] sm:$0xff]
      %v254 = vld [vmem:[#allocation4] sm:$0xff]
      %v255 = vld [vmem:[#allocation4 + $0x8] sm:$0xff]
      %v256 = vlog2.pop %v254
      %v257 = vmul.f32 %v256, 0.6931472
      %v258 = vlog2.pop %v255
      %v259 = vmul.f32 %v258, 0.6931472
      %v260 = vadd.f32 %v252, %v257
      %v261 = vadd.f32 %v253, %v259
      %v262 = vld [vmem:[#allocation5] sm:$0xff]
      %v263 = vld [vmem:[#allocation5 + $0x8] sm:$0xff]
      %v264 = vsub.f32 %v260, %v262
      %v265 = vsub.f32 %v261, %v263
      %vm266 = vcmask 7168
      %267 = vst.msk [vmem:[#allocation14] sm:$0xff] %vm266, %v264
      %268 = vst.msk [vmem:[#allocation14 + $0x8] sm:$0xff] %vm266, %v265
    $region49: #{tpu_custom_call.1} parent=1 // pred_fallthru
      _
    // Predicated region
    $region50: #{tpu_custom_call.1} parent=1 // pred_check
      _
    $region51: #{tpu_custom_call.1} parent=1 // pred_check_branch
      %270 = sbr.rel (0) target = $region53
    $region52: #{tpu_custom_call.1} parent=1 // pred_region
      %s272 = ssub.s32 256, 256
      %273 = vsyncadd [#allocation8], %s272
      %s274 = sshll.u32 [#allocation14], 4
      %s275 = int_to_ptr.vmem [resolvable:$true] %s274
      %280 = dma.vmem_to_hbm [thread:$0]  %s275, 256, %s4, [#allocation8], 128, 128, 8
    $region53: #{tpu_custom_call.1} parent=1 // pred_fallthru
      _
    // Predicated region
    $region54: #{tpu_custom_call.1} parent=1 // pred_check
      _
    $region55: #{tpu_custom_call.1} parent=1 // pred_check_branch
      %282 = sbr.rel (0) target = $region57
    $region56: #{tpu_custom_call.1} parent=1 // pred_region
      %283 = dma.done [#allocation8], 256
    $region57: #{tpu_custom_call.1} parent=1 // pred_fallthru
      _
    %284 = vsyncpa [#allocation7], 1
    %285 = vsyncpa [#allocation10], 1
    %286 = vsyncpa [#allocation13], 1
    %287 = vsyncpa [#allocation8], 1

</llo_original>
